<compile_context>
chip_gen: v7x
topology: tpu7x:2x2x1
jax: 0.10.0
libtpu: 0.0.40
codegen_flags: <defaults>
</compile_context>

<pallas_src>
import functools
import math

import jax
import jax.numpy as jnp
from jax.experimental import pallas as pl
from jax.experimental.pallas import tpu as pltpu


# ----------------------------- kernels -------------------------------------


def _drop_path_kernel_g1(feat_ref, mask_ref, out_ref, *, scale: float):
    """Ungrouped path (C % 128 == 0, or lane-sparse fallback).

    feat_ref: (tile, C)   feature dtype
    mask_ref: (tile, 1)   int8 {0,1}
    """
    m = mask_ref[...].astype(jnp.float32) * scale            # (tile, 1), exact f32
    out_ref[...] = (feat_ref[...] * m).astype(out_ref.dtype)


def _drop_path_kernel_grouped(feat_ref, mask_ref, s_ref, out_ref):
    """`group` original rows packed into one lane-dense super-row.

    feat_ref: (tile, group*C)   feature dtype
    mask_ref: (tile, group)     int8 {0,1}
    s_ref:    (group, group*C)  f32, entries in {0, 1/keep_prob}
    Lane expansion on the (otherwise idle) MXU: m = mask @ S, so lane j of
    super-row r receives scale * mask[r, j // C].  No divides / select chains
    on the VALU — the kernel stays HBM-bound.
    """
    mask_f = mask_ref[...].astype(jnp.float32)
    m = jnp.dot(mask_f, s_ref[...], preferred_element_type=jnp.float32)
    out_ref[...] = (feat_ref[...] * m).astype(out_ref.dtype)


# --------------------------- tiling helpers ---------------------------------


def _pick_group(C: int) -> int:
    """Smallest g such that (g*C) % 128 == 0 (lane-dense super-rows)."""
    if C % 128 == 0:
        return 1
    group = math.lcm(C, 128) // C          # <= 128 by construction
    # Guard: for pathological channel counts the (group, group*C) f32 selection
    # matrix gets large; fall back to the ungrouped (lane-sparse but correct)
    # layout there.
    if group * group * C * 4 > (1 << 20):
        return 1
    return group


def _choose_tile_rows(n_rows: int, width: int, itemsize: int, group: int) -> int:
    """Row-tile sized from total live VMEM, not just the feature block."""
    width_vmem = ((width + 127) // 128) * 128          # lane padding in VMEM
    # Per super-row live bytes: double-buffered feature in + out blocks,
    # double-buffered mask block (int8, lane-padded to 128), plus the f32 MXU
    # expansion temp on the grouped path.
    per_row = 2 * (2 * width_vmem * itemsize + 128)
    if group > 1:
        per_row += 4 * width_vmem
    budget = 20 * 1024 * 1024                          # fits v5e/v6e/v7x limits
    tile = max(32, (budget // per_row) // 32 * 32)     # 32 | tile covers all dtypes
    if tile >= n_rows:
        if n_rows >= 64:
            # Keep >= 2 grid programs so v7x can shard the "parallel" row axis
            # across both TensorCores.
            tile = ((pl.cdiv(n_rows, 2) + 31) // 32) * 32
        else:
            tile = n_rows                              # single full-extent block
    return tile


# ----------------------------- pallas wrapper -------------------------------


def _drop_path_call(features, keep_i8, scale, group, donate_features=False):
    """features: [N, C] with N % group == 0; keep_i8: [N] int8 {0,1}."""
    N, C = features.shape
    dtype = features.dtype
    itemsize = jnp.dtype(dtype).itemsize
    width = group * C
    n_rows = N // group

    feat2 = features.reshape(n_rows, width)            # bitcast, no data movement
    mask2 = keep_i8.reshape(n_rows, group)

    tile_rows = _choose_tile_rows(n_rows, width, itemsize, group)
    grid = (pl.cdiv(n_rows, tile_rows),)

    # Explicit scoped-VMEM limit covering everything live per step.
    width_vmem = ((width + 127) // 128) * 128
    feat_blk = tile_rows * width_vmem * itemsize
    mask_blk = tile_rows * 128                          # int8, lane-padded
    s_blk = (((group + 7) // 8) * 8) * width_vmem * 4 if group > 1 else 0
    mxu_tmp = tile_rows * width_vmem * 4 if group > 1 else 0
    vmem_limit = int(min(2 * (2 * feat_blk + mask_blk + s_blk) + mxu_tmp + (4 << 20),
                         64 * 1024 * 1024))

    compiler_params = pltpu.CompilerParams(
        dimension_semantics=("parallel",),
        vmem_limit_bytes=vmem_limit,
    )

    if group == 1:
        kernel = functools.partial(_drop_path_kernel_g1, scale=scale)
        in_specs = [
            pl.BlockSpec((tile_rows, width), lambda i: (i, 0)),
            pl.BlockSpec((tile_rows, 1), lambda i: (i, 0)),
        ]
        args = (feat2, mask2)
    else:
        # Constant selection matrix with the exact f32 scale folded in:
        # S[k, j] = scale if j // C == k else 0.   (group, width) f32, tiny.
        lane_owner = jnp.arange(width, dtype=jnp.int32) // C
        sel = lane_owner[None, :] == jnp.arange(group, dtype=jnp.int32)[:, None]
        s_mat = jnp.where(sel, jnp.float32(scale), jnp.float32(0.0))
        kernel = _drop_path_kernel_grouped
        in_specs = [
            pl.BlockSpec((tile_rows, width), lambda i: (i, 0)),
            pl.BlockSpec((tile_rows, group), lambda i: (i, 0)),
            pl.BlockSpec((group, width), lambda i: (0, 0)),   # fetched once
        ]
        args = (feat2, mask2, s_mat)

    out2 = pl.pallas_call(
        kernel,
        out_shape=jax.ShapeDtypeStruct((n_rows, width), dtype),
        grid=grid,
        in_specs=in_specs,
        out_specs=pl.BlockSpec((tile_rows, width), lambda i: (i, 0)),
        compiler_params=compiler_params,
        input_output_aliases=({0: 0} if donate_features else {}),
    )(*args)

    return out2.reshape(N, C)                           # bitcast back


def drop_path_pallas(features, keep_i8, scale, donate_features=False):
    """features: [N, C]; keep_i8: [N] int8 {0,1}; scale: python float."""
    N, C = features.shape
    group = _pick_group(C)
    n_main = (N // group) * group

    if n_main == N:
        # Common case: pure bitcast view, zero extra HBM passes.
        return _drop_path_call(features, keep_i8, scale, group, donate_features)

    if n_main == 0:
        # Fewer rows than one super-row: plain JAX is cheapest.
        m = keep_i8.astype(jnp.float32) * scale
        return (features * m[:, None]).astype(features.dtype)

    # TODO(synk): N % group != 0 forces an XLA slice + concatenate copy around
    # the kernel; pad N to a multiple of `group` upstream to stay zero-copy.
    main = _drop_path_call(features[:n_main], keep_i8[:n_main], scale, group,
                           donate_features=False)
    tail_m = keep_i8[n_main:].astype(jnp.float32) * scale
    tail = (features[n_main:] * tail_m[:, None]).astype(features.dtype)
    return jnp.concatenate([main, tail], axis=0)


def minkowski_drop_path(
    features: jax.Array,   # [N, C] sparse-tensor features (x.F)
    batch_idx: jax.Array,  # [N] int32, sample id of each point
    num_samples: int,      # B = number of decomposed batch samples
    key: jax.Array,        # PRNG key replacing numpy's random.uniform
    *,
    drop_prob: float = 0.0,
    scale_by_keep: bool = True,
    training: bool = True,
    donate_features: bool = False,
):
    """JAX/Pallas equivalent of MinkowskiDropPath.forward."""
    if drop_prob == 0.0 or not training:
        return features

    keep_prob = 1.0 - drop_prob
    # One uniform draw per decomposed batch sample: keep iff u > drop_prob.
    u = jax.random.uniform(key, (num_samples,))
    sample_keep = (u > drop_prob).astype(jnp.int8)          # [B] of {0, 1}
    scale = float(1.0 / keep_prob) if (keep_prob > 0.0 and scale_by_keep) else 1.0
    # Expand per-sample decision to a per-row int8 mask (N bytes of glue).
    keep_rows = jnp.take(sample_keep, batch_idx)            # [N] int8
    # Hot path: row-masked scale inside the Pallas kernel.
    return drop_path_pallas(features, keep_rows, scale, donate_features)


# ------------------------------- demo / check -------------------------------

if __name__ == "__main__":
    root = jax.random.PRNGKey(0)

    def reference(features, batch_idx, num_samples, key, drop_prob, scale_by_keep=True):
        keep_prob = 1.0 - drop_prob
        u = jax.random.uniform(key, (num_samples,))
        mask = (u > drop_prob).astype(jnp.float32)
        if keep_prob > 0.0 and scale_by_keep:
            mask = mask / keep_prob
        return features * jnp.take(mask, batch_idx)[:, None]

    def make_case(key, points_per_sample, C, dtype=jnp.float32):
        n = sum(points_per_sample)
        feats = jax.random.normal(key, (n, C), dtype=dtype)
        bidx = jnp.concatenate(
            [jnp.full((m,), b, dtype=jnp.int32)
             for b, m in enumerate(points_per_sample)])
        return feats, bidx, len(points_per_sample)

    drop_prob = 0.35
    cases = [
        ((33, 27), 32),          # N % group == 0 -> single zero-copy kernel call
        ((520, 300, 217), 32),   # N % group != 0 -> kernel main + tiny JAX tail
        ((40, 21), 128),         # C % 128 == 0   -> ungrouped direct path
    ]
    for i, (pts, C) in enumerate(cases):
        k_feat, k_drop = jax.random.split(jax.random.fold_in(root, i))
        feats, bidx, B = make_case(k_feat, pts, C)
        out = minkowski_drop_path(
            feats, bidx, B, k_drop,
            drop_prob=drop_prob, scale_by_keep=True, training=True)
        out = jax.block_until_ready(out)
        ref = reference(feats, bidx, B, k_drop, drop_prob)
        assert out.shape == feats.shape, f"case {i}: bad shape {out.shape}"
        assert jnp.allclose(out, ref, rtol=1e-5, atol=1e-5), f"case {i}: mismatch"

    # Eval / drop_prob == 0.0 is a passthrough (matches the PyTorch module).
    feats, bidx, B = make_case(jax.random.fold_in(root, 99), (10, 6), 32)
    assert minkowski_drop_path(feats, bidx, B, root, drop_prob=0.0) is feats

    print("KERNEL_OK")
</pallas_src>

<mosaic_0001>
module attributes {stable_mosaic.version = 11 : i64} {
  func.func @_drop_path_kernel_grouped(%arg0: i32, %arg1: memref<15x128xf32, #tpu.memory_space<vmem>>, %arg2: memref<15x4xi8, #tpu.memory_space<vmem>>, %arg3: memref<4x128xf32, #tpu.memory_space<vmem>>, %arg4: memref<15x128xf32, #tpu.memory_space<vmem>>) attributes {dimension_semantics = [#tpu.dimension_semantics<parallel>], iteration_bounds = array<i64: 1>, scalar_prefetch = 0 : i64, scratch_operands = 0 : i64, tpu.core_type = #tpu.core_type<tc>, window_params = [{transform_indices = @transform_0, window_bounds = array<i64: 15, 128>}, {transform_indices = @transform_1, window_bounds = array<i64: 15, 4>}, {pipeline_mode = #tpu.pipeline_mode<synchronous>, transform_indices = @transform_2, window_bounds = array<i64: 4, 128>}, {transform_indices = @transform_3, window_bounds = array<i64: 15, 128>}]} {
    %c0 = arith.constant 0 : index
    %c0_0 = arith.constant 0 : index
    %0 = vector.load %arg2[%c0, %c0_0] : memref<15x4xi8, #tpu.memory_space<vmem>>, vector<15x4xi8>
    %1 = arith.sitofp %0 : vector<15x4xi8> to vector<15x4xf32>
    %c0_1 = arith.constant 0 : index
    %c0_2 = arith.constant 0 : index
    %2 = vector.load %arg3[%c0_1, %c0_2] : memref<4x128xf32, #tpu.memory_space<vmem>>, vector<4x128xf32>
    %cst = arith.constant dense<0.000000e+00> : vector<15x128xf32>
    %3 = tpu.matmul %1, %2, %cst {dimension_numbers = #tpu.dot_dimension_numbers<[1], [0], [0], [1], [0, 0, 1, 1], [], []>} : vector<15x4xf32>, vector<4x128xf32>, vector<15x128xf32> -> vector<15x128xf32>
    %c0_3 = arith.constant 0 : index
    %c0_4 = arith.constant 0 : index
    %4 = vector.load %arg1[%c0_3, %c0_4] : memref<15x128xf32, #tpu.memory_space<vmem>>, vector<15x128xf32>
    %5 = arith.mulf %4, %3 : vector<15x128xf32>
    %c0_5 = arith.constant 0 : index
    %c0_6 = arith.constant 0 : index
    %6 = vector.load %arg4[%c0_5, %c0_6] : memref<15x128xf32, #tpu.memory_space<vmem>>, vector<15x128xf32>
    tpu.vector_store %arg4[%c0_5, %c0_6], %5 {strides = array<i32>} : memref<15x128xf32, #tpu.memory_space<vmem>>, vector<15x128xf32>,
    return
  }
  func.func @transform_0(%arg0: i32) -> (i32, i32) {
    %c0_i32 = arith.constant 0 : i32
    %c0_i32_0 = arith.constant 0 : i32
    return %arg0, %c0_i32 : i32, i32
  }
  func.func @transform_1(%arg0: i32) -> (i32, i32) {
    %c0_i32 = arith.constant 0 : i32
    %c0_i32_0 = arith.constant 0 : i32
    return %arg0, %c0_i32 : i32, i32
  }
  func.func @transform_2(%arg0: i32) -> (i32, i32) {
    %c0_i32 = arith.constant 0 : i32
    %c0_i32_0 = arith.constant 0 : i32
    %c0_i32_1 = arith.constant 0 : i32
    return %c0_i32, %c0_i32_0 : i32, i32
  }
  func.func @transform_3(%arg0: i32) -> (i32, i32) {
    %c0_i32 = arith.constant 0 : i32
    %c0_i32_0 = arith.constant 0 : i32
    return %arg0, %c0_i32 : i32, i32
  }
}

</mosaic_0001>

<llo_original>
// kernel: tpu_custom_call.1
$region0: #{tpu_custom_call.1}
  #allocation0 [shape = 'u32[]', space=smem, size = 0x4, offset = 0x4, fixed_abs, tag = 'smem constant byte address 0x4 - core index']
  #allocation1 [shape = 'u32[144,128]{1,0:T(1,128)}', space=vmem, size = 0x12000, scoped, tag = 'internal scratch']
  %s0 = inlined_call_operand.hbm [shape: f32[15,128], index: 0, kind: input, shape index: {}]
  %s1 = inlined_call_operand.vmem [shape: s8[15,4], index: 1, kind: input, shape index: {}]
  %s2 = inlined_call_operand.vmem [shape: f32[4,128], index: 2, kind: input, shape index: {}]
  %s3 = inlined_call_operand.hbm [shape: f32[15,128], index: 3, kind: output, shape index: {}]
  %s4 = sld [smem:[#allocation0]]
  $region26: #{tpu_custom_call.1} parent=0
    _
  %s6 = ssub.s32 1, %s4
  %s7 = scalar_select 0, %s6, %s4
  $region1: #{tpu_custom_call.1} parent=0
    #allocation2 [shape = 'u8[8192]{0}', space=vmem, size = 0x2000, scoped, tag = 'input window, operand 0, single buffered']
    #allocation3 [shape = 's32[1]{0}', space=sflag, size = 0x4, scoped, tag = 'scoped memory for tpu_custom_call.1']
    #allocation4 [shape = 's32[1]{0}', space=sflag, size = 0x4, scoped, tag = 'scoped memory for tpu_custom_call.1']
    #allocation5 [shape = 'u8[8192]{0}', space=vmem, size = 0x2000, scoped, tag = 'output window, operand 0, single buffered']
    %8 = vsyncpa [#allocation3], 0
    %9 = vsyncpa [#allocation4], 0
    // Predicated region
    $region2: #{tpu_custom_call.1} parent=1 // pred_check
      _
    $region3: #{tpu_custom_call.1} parent=1 // pred_check_branch
      %11 = sbr.rel (0) target = $region5
    $region4: #{tpu_custom_call.1} parent=1 // pred_region
      %s13 = ssub.s32 256, 256
      %14 = vsyncadd [#allocation3], %s13
      %s15 = sshll.u32 [#allocation2], 4
      %s16 = int_to_ptr.vmem [resolvable:$true] %s15
      %21 = dma.hbm_to_vmem [thread:$0]  %s0, 256, %s16, [#allocation3], 128, 128, 8
    $region5: #{tpu_custom_call.1} parent=1 // pred_fallthru
      _
    // Predicated region
    $region6: #{tpu_custom_call.1} parent=1 // pred_check
      _
    $region7: #{tpu_custom_call.1} parent=1 // pred_check_branch
      %23 = sbr.rel (0) target = $region9
    $region8: #{tpu_custom_call.1} parent=1 // pred_region
      _
    $region9: #{tpu_custom_call.1} parent=1 // pred_fallthru
      _
    // Predicated region
    $region10: #{tpu_custom_call.1} parent=1 // pred_check
      _
    $region11: #{tpu_custom_call.1} parent=1 // pred_check_branch
      %25 = sbr.rel (0) target = $region13
    $region12: #{tpu_custom_call.1} parent=1 // pred_region
      _
    $region13: #{tpu_custom_call.1} parent=1 // pred_fallthru
      _
    // Predicated region
    $region14: #{tpu_custom_call.1} parent=1 // pred_check
      _
    $region15: #{tpu_custom_call.1} parent=1 // pred_check_branch
      %27 = sbr.rel (0) target = $region17
    $region16: #{tpu_custom_call.1} parent=1 // pred_region
      %28 = dma.done [#allocation3], 256
    $region17: #{tpu_custom_call.1} parent=1 // pred_fallthru
      _
    %v29 = vld [vmem:[%s1] sm:$0x3]
    %v30 = vld [vmem:[%s1 + $0x2] sm:$0x3]
    %v31 = vunpack.c.0.s8 %v29
    %v32 = vunpack.c.0.s8 %v30
    %v33 = vcvt.s32.f32 %v31
    %v34 = vcvt.s32.f32 %v32
    %v35 = vld [vmem:[%s2] sm:$0xf]
    %vm36 = vcmask 31744
    %v38 = vsel %vm36, %v33, 0
    %v41 = vsel %vm36, %v34, 0
    %vm43 = vcmask 1043456
    %v45 = vsel %vm43, %v35, 0
    %47 = vmatprep.subr.mxu0 0.0
    %48 = vmatpush1.msra.mxu0 %v45
    %49 = vmatprep.subr.mxu0 0.0
    %50 = vmatpush1.msra.mxu0 0.0
    %51 = vmatprep.subr.mxu0 0.0
    %52 = vmatpush1.msra.mxu0 0.0
    %53 = vmatprep.subr.mxu0 0.0
    %54 = vmatpush1.msra.mxu0 0.0
    %55 = vmatprep.subr.mxu0 0.0
    %56 = vmatpush1.msra.mxu0 0.0
    %57 = vmatprep.subr.mxu0 0.0
    %58 = vmatpush1.msra.mxu0 0.0
    %59 = vmatprep.subr.mxu0 0.0
    %60 = vmatpush1.msra.mxu0 0.0
    %61 = vmatprep.subr.mxu0 0.0
    %62 = vmatpush1.msra.mxu0 0.0
    %63 = vmatprep.subr.mxu0 0.0
    %64 = vmatpush1.msra.mxu0 0.0
    %65 = vmatprep.subr.mxu0 0.0
    %66 = vmatpush1.msra.mxu0 0.0
    %67 = vmatprep.subr.mxu0 0.0
    %68 = vmatpush1.msra.mxu0 0.0
    %69 = vmatprep.subr.mxu0 0.0
    %70 = vmatpush1.msra.mxu0 0.0
    %71 = vmatprep.subr.mxu0 0.0
    %72 = vmatpush1.msra.mxu0 0.0
    %73 = vmatprep.subr.mxu0 0.0
    %74 = vmatpush1.msra.mxu0 0.0
    %75 = vmatprep.subr.mxu0 0.0
    %76 = vmatpush1.msra.mxu0 0.0
    %77 = vmatprep.subr.mxu0 0.0
    %78 = vmatpush1.msra.mxu0 0.0
    %79 = vmatprep.subr.mxu0 0.0
    %80 = vmatpush1.msra.mxu0 0.0
    %81 = vmatprep.subr.mxu0 0.0
    %82 = vmatpush1.msra.mxu0 0.0
    %83 = vmatprep.subr.mxu0 0.0
    %84 = vmatpush1.msra.mxu0 0.0
    %85 = vmatprep.subr.mxu0 0.0
    %86 = vmatpush1.msra.mxu0 0.0
    %87 = vmatprep.subr.mxu0 0.0
    %88 = vmatpush1.msra.mxu0 0.0
    %89 = vmatprep.subr.mxu0 0.0
    %90 = vmatpush1.msra.mxu0 0.0
    %91 = vmatprep.subr.mxu0 0.0
    %92 = vmatpush1.msra.mxu0 0.0
    %93 = vmatprep.subr.mxu0 0.0
    %94 = vmatpush1.msra.mxu0 0.0
    %95 = vmatprep.subr.mxu0 0.0
    %96 = vmatpush1.msra.mxu0 0.0
    %97 = vmatprep.subr.mxu0 0.0
    %98 = vmatpush1.msra.mxu0 0.0
    %99 = vmatprep.subr.mxu0 0.0
    %100 = vmatpush1.msra.mxu0 0.0
    %101 = vmatprep.subr.mxu0 0.0
    %102 = vmatpush1.msra.mxu0 0.0
    %103 = vmatprep.subr.mxu0 0.0
    %104 = vmatpush1.msra.mxu0 0.0
    %105 = vmatprep.subr.mxu0 0.0
    %106 = vmatpush1.msra.mxu0 0.0
    %107 = vmatprep.subr.mxu0 0.0
    %108 = vmatpush1.msra.mxu0 0.0
    %109 = vmatprep.subr.mxu0 0.0
    %110 = vmatpush1.msra.mxu0 0.0
    %111 = vmatprep.mubr.f32.mxu0 0.0
    %112 = vmatmul.mubr.f32.gmra.mrb[0].mxu0 %v38
    %v113 = vpop.f32.mrb[0].mxu0
    %v114 = vadd.f32 0.0, %v113
    %v115 = vpop.f32.mrb[0].mxu0
    %116 = vmatprep.mubr.f32.mxu0 0.0
    %117 = vmatmul.mubr.f32.gmra.mrb[0].mxu0 %v41
    %v118 = vpop.f32.mrb[0].mxu0
    %v119 = vadd.f32 0.0, %v118
    %v120 = vpop.f32.mrb[0].mxu0
    %121 = vdwg.mxu0
    %v122 = vld [vmem:[#allocation2] sm:$0xff]
    %v123 = vld [vmem:[#allocation2 + $0x8] sm:$0x7f]
    %v124 = vmul.f32 %v122, %v114
    %v125 = vmul.f32 %v123, %v119
    %126 = vst [vmem:[#allocation5] sm:$0xff] %v124
    %127 = vst [vmem:[#allocation5 + $0x8] sm:$0x7f] %v125
    // Predicated region
    $region18: #{tpu_custom_call.1} parent=1 // pred_check
      _
    $region19: #{tpu_custom_call.1} parent=1 // pred_check_branch
      %129 = sbr.rel (0) target = $region21
    $region20: #{tpu_custom_call.1} parent=1 // pred_region
      %s131 = ssub.s32 256, 256
      %132 = vsyncadd [#allocation4], %s131
      %s133 = sshll.u32 [#allocation5], 4
      %s134 = int_to_ptr.vmem [resolvable:$true] %s133
      %139 = dma.vmem_to_hbm [thread:$0]  %s134, 256, %s3, [#allocation4], 128, 128, 8
    $region21: #{tpu_custom_call.1} parent=1 // pred_fallthru
      _
    // Predicated region
    $region22: #{tpu_custom_call.1} parent=1 // pred_check
      _
    $region23: #{tpu_custom_call.1} parent=1 // pred_check_branch
      %141 = sbr.rel (0) target = $region25
    $region24: #{tpu_custom_call.1} parent=1 // pred_region
      %142 = dma.done [#allocation4], 256
    $region25: #{tpu_custom_call.1} parent=1 // pred_fallthru
      _
    %143 = vsyncpa [#allocation3], 1
    %144 = vsyncpa [#allocation4], 1

</llo_original>
